<compile_context>
chip_gen: v7x
topology: tpu7x:2x2x1
jax: 0.10.0
libtpu: 0.0.40
codegen_flags: <defaults>
</compile_context>

<pallas_src>
import functools

import jax
import jax.numpy as jnp
from jax import lax
from jax.experimental import pallas as pl
from jax.experimental.pallas import tpu as pltpu


def _label_smoothing_ce_kernel(n_ref, x_ref, tgt_ref, out_ref, *,
                               confidence, smoothing, tm, compute_dtype):
    i = pl.program_id(0)
    n_true = n_ref[0]                                # SMEM scalar (true batch)

    x = x_ref[...]                                   # (TM, C) input dtype
    if x.dtype != compute_dtype:
        x = x.astype(compute_dtype)
    tgt = tgt_ref[...]                               # (TM, 1) int32
    rows, c = x.shape

    # Sanitize rows beyond the true batch size.  The last tile may be a
    # partial block, so its out-of-range VMEM rows hold unspecified data;
    # zero them *before* max/exp/sum so NaN/Inf garbage can't propagate.
    row_ids = i * tm + lax.broadcasted_iota(jnp.int32, (rows, 1), 0)
    valid = row_ids < n_true                         # (TM, 1) bool
    x = jnp.where(valid, x, jnp.zeros((), x.dtype))

    # Row-wise log-sum-exp; never materialize the full logprobs tile.
    m = jnp.max(x, axis=-1, keepdims=True)                               # (TM,1)
    e = jnp.exp(x - m)                               # stays bf16 on v6e/v7x
    sum_e = jnp.sum(e, axis=-1, keepdims=True, dtype=jnp.float32)        # (TM,1)
    norm = m.astype(jnp.float32) + jnp.log(sum_e)                        # m+lse

    # Fused weighted reduction replaces gather + mean:
    #   loss_row = (m+lse) - sum_c x_c * w_c,
    #   w_c = onehot_c * confidence + smoothing / C
    class_ids = lax.broadcasted_iota(jnp.int32, (rows, c), 1)
    w = jnp.where(class_ids == tgt,
                  jnp.float32(confidence + smoothing / c),
                  jnp.float32(smoothing / c))                            # (TM,C)
    sum_xw = jnp.sum(x.astype(jnp.float32) * w, axis=-1, keepdims=True)  # f32 acc

    loss = jnp.where(valid, norm - sum_xw, 0.0)                          # (TM,1)
    out_ref[...] = jnp.sum(loss).reshape(1, 1, 1)    # per-tile partial sum


def _tpu_device_kind():
    try:
        for d in jax.devices():
            if d.platform == "tpu":
                return d.device_kind.lower()
    except Exception:
        pass
    return ""


def _vmem_capacity_bytes(kind):
    try:
        cap = int(pltpu.get_tpu_info().vmem_capacity_bytes)
        if cap > 0:
            return cap
    except Exception:
        pass
    # Fallback from device kind: v7x has 64 MiB per TC, older gens 128 MiB.
    return (64 << 20) if "v7" in kind else (128 << 20)


def _vmem_budgets(kind):
    cap = max(_vmem_capacity_bytes(kind), 32 << 20)
    tile_budget = min(cap // 3, 40 << 20)      # working-set budget for sizing
    vmem_limit = min((cap * 3) // 4, 96 << 20)  # explicit scoped-VMEM limit
    return tile_budget, vmem_limit


def _pick_tile_rows(n, c, in_itemsize, compute_itemsize, budget_bytes):
    """Largest multiple-of-8 row tile whose working set fits the budget.

    Per row:  double-buffered input tile (2*C*in_itemsize)
            + compute copy / exp temporaries (2*C*compute_itemsize)
            + f32 weight tile + f32 product + int32 class iota (~12*C)
            + lane-padded (TM,1) int32 target, double-buffered (2*128*4 B).
    """
    per_row = c * (2 * in_itemsize + 2 * compute_itemsize + 12) + 1024
    tm = budget_bytes // max(per_row, 1)
    tm = int(min(max((tm // 8) * 8, 8), 4096))
    tm = min(tm, ((n + 7) // 8) * 8)   # don't exceed (rounded-up) batch
    return max(tm, 8)


def label_smoothing_cross_entropy(x, target, smoothing=0.1, tile_rows=None):
    """Pallas TPU implementation of LabelSmoothingCrossEntropy.forward.

    x:      (N, C) float logits
    target: (N,)   integer class indices
    returns: scalar f32 mean loss
    """
    confidence = 1.0 - smoothing
    n, c = x.shape
    in_itemsize = jnp.dtype(x.dtype).itemsize

    kind = _tpu_device_kind()
    # bf16 elementwise/exp only where the VPU/EUP are bf16-capable (v6e/v7x).
    if x.dtype == jnp.bfloat16 and ("v6" in kind or "v7" in kind):
        compute_dtype = jnp.bfloat16
    else:
        compute_dtype = jnp.float32
    compute_itemsize = jnp.dtype(compute_dtype).itemsize

    tile_budget, vmem_limit = _vmem_budgets(kind)
    tm = tile_rows if tile_rows is not None else _pick_tile_rows(
        n, c, in_itemsize, compute_itemsize, tile_budget)
    tm = max(8, (int(tm) // 8) * 8)
    tm = min(tm, ((n + 7) // 8) * 8)

    num_tiles = (n + tm - 1) // tm           # ragged: partial tail block, no pad

    tgt2d = target.astype(jnp.int32).reshape(n, 1)
    n_arr = jnp.asarray([n], dtype=jnp.int32)   # SMEM scalar prefetch

    kernel = functools.partial(
        _label_smoothing_ce_kernel,
        confidence=float(confidence),
        smoothing=float(smoothing),
        tm=tm,
        compute_dtype=compute_dtype,
    )

    # TODO(synk): for very large vocabularies (C >= ~64k) the class axis should
    # also be tiled with an online (flash-style) LSE; not needed at these sizes.
    partials = pl.pallas_call(
        kernel,
        out_shape=jax.ShapeDtypeStruct((num_tiles, 1, 1), jnp.float32),
        grid_spec=pltpu.PrefetchScalarGridSpec(
            num_scalar_prefetch=1,
            grid=(num_tiles,),
            in_specs=[
                pl.BlockSpec((tm, c), lambda i, n_ref: (i, 0)),
                pl.BlockSpec((tm, 1), lambda i, n_ref: (i, 0)),
            ],
            out_specs=pl.BlockSpec((1, 1, 1), lambda i, n_ref: (i, 0, 0)),
        ),
        compiler_params=pltpu.CompilerParams(
            dimension_semantics=("parallel",),      # shards tiles across TCs on v7x
            vmem_limit_bytes=int(vmem_limit)),
        cost_estimate=pl.CostEstimate(
            flops=5 * n * c,
            transcendentals=n * c,
            bytes_accessed=n * c * in_itemsize + n * 4 + num_tiles * 4),
    )(n_arr, x, tgt2d)

    return jnp.sum(partials) * (1.0 / n)


def _reference(x, target, smoothing=0.1):
    confidence = 1.0 - smoothing
    logprobs = jax.nn.log_softmax(x.astype(jnp.float32), axis=-1)
    nll = -jnp.take_along_axis(logprobs, target[:, None], axis=-1)[:, 0]
    smooth = -jnp.mean(logprobs, axis=-1)
    return jnp.mean(confidence * nll + smoothing * smooth)


if __name__ == "__main__":
    key = jax.random.PRNGKey(0)
    kx, kt = jax.random.split(key)

    # Case 1: small aligned shape, single tile, f32.
    N, C = 8, 32
    x = jax.random.normal(kx, (N, C), dtype=jnp.float32)
    target = jax.random.randint(kt, (N,), 0, C, dtype=jnp.int32)
    loss = jax.block_until_ready(label_smoothing_cross_entropy(x, target, 0.1))
    ref = _reference(x, target, 0.1)
    assert jnp.allclose(loss, ref, atol=1e-5, rtol=1e-5), (loss, ref)

    # Case 2: ragged batch + multi-tile grid (exercises partial tail block,
    # in-kernel sanitizing/masking, per-tile partial sums), bf16 logits.
    kx2, kt2 = jax.random.split(kt)
    N2, C2 = 37, 160
    x2 = jax.random.normal(kx2, (N2, C2), dtype=jnp.bfloat16)
    t2 = jax.random.randint(kt2, (N2,), 0, C2, dtype=jnp.int32)
    loss2 = jax.block_until_ready(
        label_smoothing_cross_entropy(x2, t2, 0.1, tile_rows=16))
    ref2 = _reference(x2, t2, 0.1)
    # bf16-native elementwise/exp path (v6e/v7x) trades a little precision.
    assert jnp.allclose(loss2, ref2, atol=1e-2, rtol=1e-2), (loss2, ref2)

    print("KERNEL_OK")
</pallas_src>

<mosaic_0001>
module attributes {stable_mosaic.version = 11 : i64} {
  func.func @_label_smoothing_ce_kernel(%arg0: i32, %arg1: memref<1xi32, #tpu.memory_space<smem>>, %arg2: memref<8x32xf32, #tpu.memory_space<vmem>>, %arg3: memref<8x1xi32, #tpu.memory_space<vmem>>, %arg4: memref<1x1x1xf32, #tpu.memory_space<vmem>>) attributes {dimension_semantics = [#tpu.dimension_semantics<parallel>], iteration_bounds = array<i64: 1>, scalar_prefetch = 1 : i64, scratch_operands = 0 : i64, tpu.core_type = #tpu.core_type<tc>, window_params = [{transform_indices = @transform_0, window_bounds = array<i64: 8, 32>}, {transform_indices = @transform_1, window_bounds = array<i64: 8, 1>}, {transform_indices = @transform_2, window_bounds = array<i64: 1, 1, 1>}]} {
    %c0 = arith.constant 0 : index
    %0 = memref.load %arg1[%c0] : memref<1xi32, #tpu.memory_space<smem>>
    %c0_0 = arith.constant 0 : index
    %c0_1 = arith.constant 0 : index
    %1 = vector.load %arg2[%c0_0, %c0_1] : memref<8x32xf32, #tpu.memory_space<vmem>>, vector<8x32xf32>
    %c0_2 = arith.constant 0 : index
    %c0_3 = arith.constant 0 : index
    %2 = vector.load %arg3[%c0_2, %c0_3] : memref<8x1xi32, #tpu.memory_space<vmem>>, vector<8x1xi32>
    %c8_i32 = arith.constant 8 : i32
    %3 = arith.muli %arg0, %c8_i32 : i32
    %4 = tpu.iota {dimensions = array<i32: 0>} : vector<8x1xi32>
    %5 = vector.broadcast %3 : i32 to vector<8x1xi32>
    %6 = arith.addi %5, %4 : vector<8x1xi32>
    %7 = vector.broadcast %0 : i32 to vector<8x1xi32>
    %8 = arith.cmpi slt, %6, %7 : vector<8x1xi32>
    %cst = arith.constant 0.000000e+00 : f32
    %9 = vector.shape_cast %8 : vector<8x1xi1> to vector<8x1xi1>
    %10 = vector.broadcast %9 : vector<8x1xi1> to vector<8x32xi1>
    %11 = vector.broadcast %cst : f32 to vector<8x32xf32>
    %12 = arith.select %10, %1, %11 : vector<8x32xi1>, vector<8x32xf32>
    %cst_4 = arith.constant dense<0xFF800000> : vector<8xf32>
    %13 = vector.multi_reduction <maximumf>, %12, %cst_4 [1] : vector<8x32xf32> to vector<8xf32>
    %14 = vector.shape_cast %13 : vector<8xf32> to vector<8x1xf32>
    %15 = vector.broadcast %14 : vector<8x1xf32> to vector<8x32xf32>
    %16 = arith.subf %12, %15 : vector<8x32xf32>
    %17 = math.exp %16 : vector<8x32xf32>
    %cst_5 = arith.constant dense<0.000000e+00> : vector<8xf32>
    %18 = vector.multi_reduction <add>, %17, %cst_5 [1] : vector<8x32xf32> to vector<8xf32>
    %19 = vector.shape_cast %18 : vector<8xf32> to vector<8x1xf32>
    %20 = math.log %19 : vector<8x1xf32>
    %21 = arith.addf %14, %20 : vector<8x1xf32>
    %22 = tpu.iota {dimensions = array<i32: 1>} : vector<8x32xi32>
    %23 = vector.broadcast %2 : vector<8x1xi32> to vector<8x32xi32>
    %24 = arith.cmpi eq, %22, %23 : vector<8x32xi32>
    %cst_6 = arith.constant 0.903124988 : f32
    %cst_7 = arith.constant 3.125000e-03 : f32
    %25 = vector.broadcast %cst_6 : f32 to vector<8x32xf32>
    %26 = vector.broadcast %cst_7 : f32 to vector<8x32xf32>
    %27 = arith.select %24, %25, %26 : vector<8x32xi1>, vector<8x32xf32>
    %28 = arith.mulf %12, %27 : vector<8x32xf32>
    %cst_8 = arith.constant dense<0.000000e+00> : vector<8xf32>
    %29 = vector.multi_reduction <add>, %28, %cst_8 [1] : vector<8x32xf32> to vector<8xf32>
    %30 = vector.shape_cast %29 : vector<8xf32> to vector<8x1xf32>
    %31 = arith.subf %21, %30 : vector<8x1xf32>
    %cst_9 = arith.constant 0.000000e+00 : f32
    %32 = vector.broadcast %cst_9 : f32 to vector<8x1xf32>
    %33 = arith.select %8, %31, %32 : vector<8x1xi1>, vector<8x1xf32>
    %34 = vector.shape_cast %33 : vector<8x1xf32> to vector<1x8x1xf32>
    %cst_10 = arith.constant dense<0.000000e+00> : vector<1xf32>
    %35 = vector.multi_reduction <add>, %34, %cst_10 [1, 2] : vector<1x8x1xf32> to vector<1xf32>
    %36 = vector.shape_cast %35 : vector<1xf32> to vector<1x1x1xf32>
    %37 = vector.extract %36[0, 0, 0] : f32 from vector<1x1x1xf32>
    %38 = vector.broadcast %37 : f32 to vector<1x1x1xf32>
    %c0_11 = arith.constant 0 : index
    %c0_12 = arith.constant 0 : index
    %c0_13 = arith.constant 0 : index
    %39 = vector.load %arg4[%c0_11, %c0_12, %c0_13] : memref<1x1x1xf32, #tpu.memory_space<vmem>>, vector<1x1x1xf32>
    tpu.vector_store %arg4[%c0_11, %c0_12, %c0_13], %38 {strides = array<i32>} : memref<1x1x1xf32, #tpu.memory_space<vmem>>, vector<1x1x1xf32>,
    return
  }
  func.func @transform_0(%arg0: i32, %arg1: memref<1xi32, #tpu.memory_space<smem>>) -> (i32, i32) {
    %c0_i32 = arith.constant 0 : i32
    %c0_i32_0 = arith.constant 0 : i32
    return %arg0, %c0_i32 : i32, i32
  }
  func.func @transform_1(%arg0: i32, %arg1: memref<1xi32, #tpu.memory_space<smem>>) -> (i32, i32) {
    %c0_i32 = arith.constant 0 : i32
    %c0_i32_0 = arith.constant 0 : i32
    return %arg0, %c0_i32 : i32, i32
  }
  func.func @transform_2(%arg0: i32, %arg1: memref<1xi32, #tpu.memory_space<smem>>) -> (i32, i32, i32) {
    %c0_i32 = arith.constant 0 : i32
    %c0_i32_0 = arith.constant 0 : i32
    %c0_i32_1 = arith.constant 0 : i32
    return %arg0, %c0_i32, %c0_i32_0 : i32, i32, i32
  }
}

</mosaic_0001>

<llo_original>
// kernel: tpu_custom_call.1
$region0: #{tpu_custom_call.1}
  #allocation0 [shape = 'u32[]', space=smem, size = 0x4, offset = 0x4, fixed_abs, tag = 'smem constant byte address 0x4 - core index']
  #allocation1 [shape = 'u32[144,128]{1,0:T(1,128)}', space=vmem, size = 0x12000, scoped, tag = 'internal scratch']
  #allocation2 [shape = 's32[1]{0}', space=sflag, size = 0x4, scoped, tag = 'scoped memory for tpu_custom_call.1']
  #allocation3 [shape = 's32[1]{0:T(128)S(6)}', space=smem, size = 0x200, scoped, tag = 'prefetched SMEM operand 0']
  %s0 = inlined_call_operand.<no memory space> [shape: s32[1], index: 0, kind: input, shape index: {}]
  %s1 = inlined_call_operand.hbm [shape: f32[8,32], index: 1, kind: input, shape index: {}]
  %s2 = inlined_call_operand.hbm [shape: s32[8,1], index: 2, kind: input, shape index: {}]
  %s3 = inlined_call_operand.hbm [shape: f32[1,1,1], index: 3, kind: output, shape index: {}]
  %s4 = sld [smem:[#allocation0]]
  $region26: #{tpu_custom_call.1} parent=0
    _
  %s6 = ssub.s32 1, %s4
  %s7 = scalar_select 0, %s6, %s4
  %8 = sst [smem:[#allocation3]] %s0
  $region1: #{tpu_custom_call.1} parent=0
    #allocation4 [shape = 'u8[4096]{0}', space=vmem, size = 0x1000, scoped, tag = 'input window, operand 1, single buffered']
    #allocation5 [shape = 's32[1]{0}', space=sflag, size = 0x4, scoped, tag = 'scoped memory for tpu_custom_call.1']
    #allocation6 [shape = 's32[1]{0}', space=sflag, size = 0x4, scoped, tag = 'scoped memory for tpu_custom_call.1']
    #allocation7 [shape = 'u8[4096]{0}', space=vmem, size = 0x1000, scoped, tag = 'input window, operand 2, single buffered']
    #allocation8 [shape = 's32[1]{0}', space=sflag, size = 0x4, scoped, tag = 'scoped memory for tpu_custom_call.1']
    #allocation9 [shape = 'u8[512]{0}', space=vmem, size = 0x400, scoped, tag = 'output window, operand 0, single buffered']
    %9 = vsyncpa [#allocation5], 0
    %10 = vsyncpa [#allocation8], 0
    %11 = vsyncpa [#allocation6], 0
    // Predicated region
    $region2: #{tpu_custom_call.1} parent=1 // pred_check
      _
    $region3: #{tpu_custom_call.1} parent=1 // pred_check_branch
      %13 = sbr.rel (0) target = $region5
    $region4: #{tpu_custom_call.1} parent=1 // pred_region
      %s15 = ssub.s32 128, 128
      %16 = vsyncadd [#allocation5], %s15
      %s18 = sshll.u32 [#allocation4], 4
      %s19 = int_to_ptr.vmem [resolvable:$true] %s18
      %21 = dma.hbm_to_vmem [thread:$0]  %s1, 128, %s19, [#allocation5]
    $region5: #{tpu_custom_call.1} parent=1 // pred_fallthru
      _
    // Predicated region
    $region6: #{tpu_custom_call.1} parent=1 // pred_check
      _
    $region7: #{tpu_custom_call.1} parent=1 // pred_check_branch
      %23 = sbr.rel (0) target = $region9
    $region8: #{tpu_custom_call.1} parent=1 // pred_region
      %s25 = ssub.s32 128, 128
      %26 = vsyncadd [#allocation8], %s25
      %s28 = sshll.u32 [#allocation7], 4
      %s29 = int_to_ptr.vmem [resolvable:$true] %s28
      %31 = dma.hbm_to_vmem [thread:$0]  %s2, 128, %s29, [#allocation8]
    $region9: #{tpu_custom_call.1} parent=1 // pred_fallthru
      _
    // Predicated region
    $region10: #{tpu_custom_call.1} parent=1 // pred_check
      _
    $region11: #{tpu_custom_call.1} parent=1 // pred_check_branch
      %33 = sbr.rel (0) target = $region13
    $region12: #{tpu_custom_call.1} parent=1 // pred_region
      %34 = dma.done [#allocation5], 128
    $region13: #{tpu_custom_call.1} parent=1 // pred_fallthru
      _
    // Predicated region
    $region14: #{tpu_custom_call.1} parent=1 // pred_check
      _
    $region15: #{tpu_custom_call.1} parent=1 // pred_check_branch
      %36 = sbr.rel (0) target = $region17
    $region16: #{tpu_custom_call.1} parent=1 // pred_region
      %37 = dma.done [#allocation8], 128
    $region17: #{tpu_custom_call.1} parent=1 // pred_fallthru
      _
    %s38 = sld [smem:[#allocation3]]
    %v39 = vld [vmem:[#allocation4] sm:$0xff]
    %v40 = vld [vmem:[#allocation7] sm:$0xff]
    %s41 = smul.u32 0, 8
    %v42 = vlaneseq
    %v43 = vshrl.u32 %v42, 7
    %v44 = vstv %s41
    %v45 = vadd.s32 %v44, %v43
    %v46 = vstv %s38
    %vm47 = vcmp.lt.s32.totalorder %v45, %v46
    %v48 = vsel %vm47, 1, 0
    %vm49 = vcmp.eq.s32.totalorder %v48, 1
    %v50 = vsel %vm49, %v39, 0.0
    %vm51 = vcmask 261120
    %v52 = vsel %vm51, %v50, -inf
    %53 = vmax.xlane.f32.xlu0 %v52
    %v54 = vpop.xlane.xlu0 %53
    %v55 = vsub.f32 %v50, %v54
    %v56 = vmul.f32 %v55, 1.442695
    %v57 = vpow.pop %v56
    %v58 = vsel %vm51, %v57, 0.0
    %59 = vadd.xlane.f32.xlu0 %v58
    %v60 = vpop.xlane.xlu0 %59
    %v61 = vlog2.pop %v60
    %v62 = vmul.f32 %v61, 0.6931472
    %v63 = vadd.f32 %v54, %v62
    %v64 = vlaneseq
    %v65 = vand.u32 %v64, 127
    %66 = vset.pattern.permute.xlu0 0
    %67 = vperm.xlu0 %66, %v40
    %v68 = vpop.permute.xlu0 %67
    %vm69 = vcmp.eq.s32.totalorder %v65, %v68
    %v70 = vsel %vm69, 0.903125, 0.003125
    %v71 = vmul.f32 %v50, %v70
    %v72 = vsel %vm51, %v71, 0.0
    %73 = vadd.xlane.f32.xlu0 %v72
    %v74 = vpop.xlane.xlu0 %73
    %v75 = vsub.f32 %v63, %v74
    %v76 = vsel %vm47, %v75, 0.0
    %vm77 = vcmask 7168
    %v78 = vsel %vm77, %v76, 0.0
    %79 = vadd.xlane.f32.xlu0 %v78
    %v80 = vpop.xlane.xlu0 %79
    %v81 = vrot.slane %v80, 4
    %v82 = vadd.f32 %v80, %v81
    %v83 = vrot.slane %v82, 2
    %v84 = vadd.f32 %v82, %v83
    %v85 = vrot.slane %v84, 1
    %v86 = vadd.f32 %v84, %v85
    %s87 = vtos %v86
    %v88 = vstv %s87
    %vm89 = vcmask 0
    %90 = vst.msk [vmem:[#allocation9] sm:$0x1] %vm89, %v88
    // Predicated region
    $region18: #{tpu_custom_call.1} parent=1 // pred_check
      _
    $region19: #{tpu_custom_call.1} parent=1 // pred_check_branch
      %92 = sbr.rel (0) target = $region21
    $region20: #{tpu_custom_call.1} parent=1 // pred_region
      %s94 = ssub.s32 16, 16
      %95 = vsyncadd [#allocation6], %s94
      %s97 = sshll.u32 [#allocation9], 4
      %s98 = int_to_ptr.vmem [resolvable:$true] %s97
      %100 = dma.vmem_to_hbm [thread:$0]  %s98, 16, %s3, [#allocation6]
    $region21: #{tpu_custom_call.1} parent=1 // pred_fallthru
      _
    // Predicated region
    $region22: #{tpu_custom_call.1} parent=1 // pred_check
      _
    $region23: #{tpu_custom_call.1} parent=1 // pred_check_branch
      %102 = sbr.rel (0) target = $region25
    $region24: #{tpu_custom_call.1} parent=1 // pred_region
      %103 = dma.done [#allocation6], 16
    $region25: #{tpu_custom_call.1} parent=1 // pred_fallthru
      _
    %104 = vsyncpa [#allocation5], 1
    %105 = vsyncpa [#allocation8], 1
    %106 = vsyncpa [#allocation6], 1

</llo_original>
